<compile_context>
chip_gen: v7x
topology: tpu7x:2x2x1
jax: 0.10.0
libtpu: 0.0.40
codegen_flags: <defaults>
</compile_context>

<pallas_src>
import math

import jax
import jax.numpy as jnp
from jax.experimental import pallas as pl
from jax.experimental.pallas import tpu as pltpu


_LANE = 128     # last dim of every block padded to a multiple of this
_SUBLANE = 8    # second-to-last dim (batch) padded to a multiple of this


def _round_up(x, m):
    return (x + m - 1) // m * m


# ----------------------------------------------------------------------------
# Kernel: fused 4-layer masked-linear autoencoder on one batch tile.
# Weights arrive pre-masked, pre-transposed to (in, out) and cast to bf16;
# each layer is one MXU matmul (bf16 inputs, f32 accumulation) + f32 bias add.
# ----------------------------------------------------------------------------
def _autoencoder_kernel(x_ref,
                        w1_ref, b1_ref,
                        w2_ref, b2_ref,
                        w3_ref, b3_ref,
                        w4_ref, b4_ref,
                        o_ref):
    h = x_ref[...]                                  # f32 (tb, p_in0)
    for w_ref, b_ref in ((w1_ref, b1_ref), (w2_ref, b2_ref),
                         (w3_ref, b3_ref), (w4_ref, b4_ref)):
        h = jnp.dot(h.astype(jnp.bfloat16), w_ref[...],
                    preferred_element_type=jnp.float32)
        h = h + b_ref[...]                          # (1, out) broadcast, f32
    o_ref[...] = h.astype(o_ref.dtype)


# ----------------------------------------------------------------------------
# One-time parameter preparation (hoisted out of the forward path).
# ----------------------------------------------------------------------------
def prepare_autoencoder_params(params):
    """Fold mask into weight, transpose to (in, out), pad to lane multiples,
    cast weights to bf16. Call once at model-build time.

    params : list of 4 tuples (weight(out,in), mask(out,in), bias(1,out)) in
             PyTorch nn.Linear convention, ordered
             [encoder.first, encoder.second, decoder.first, decoder.second].
    """
    feat_dims = [params[0][0].shape[1]]
    for w, _, _ in params:
        feat_dims.append(w.shape[0])
    pdims = [_round_up(d, _LANE) for d in feat_dims]

    layers = []
    for li, (w, m, b) in enumerate(params):
        wt = (w * m).T                               # fold mask once; (in, out)
        p_in, p_out = pdims[li], pdims[li + 1]
        w_pad = jnp.zeros((p_in, p_out), jnp.bfloat16)
        w_pad = w_pad.at[:wt.shape[0], :wt.shape[1]].set(wt.astype(jnp.bfloat16))
        b_row = jnp.reshape(b, (1, -1)).astype(jnp.float32)
        b_pad = jnp.zeros((1, p_out), jnp.float32)
        b_pad = b_pad.at[:, :b_row.shape[1]].set(b_row)
        layers.append((w_pad, b_pad))

    return {"layers": layers, "feat_dims": feat_dims, "pdims": pdims}


# ----------------------------------------------------------------------------
# Forward pass.
# ----------------------------------------------------------------------------
def autoencoder_forward(x, prepared, *, batch_tile=256):
    layers = prepared["layers"]
    feat_dims = prepared["feat_dims"]
    pdims = prepared["pdims"]

    B, n_in = x.shape
    assert n_in == feat_dims[0], (n_in, feat_dims[0])
    n_out = feat_dims[-1]

    # Batch tiling: multiple of 8 sublanes, capped at `batch_tile` rows/step.
    tb = min(_round_up(B, _SUBLANE), _round_up(batch_tile, _SUBLANE))
    b_pad = _round_up(B, tb)

    x_pad = jnp.zeros((b_pad, pdims[0]), jnp.float32)
    x_pad = x_pad.at[:B, :n_in].set(x.astype(jnp.float32))

    # VMEM budget: weights/biases (budgeted at 2x in case the fallback path
    # double-buffers), double-buffered f32 x/out tiles, intermediate headroom.
    weight_bytes = sum(w.size * w.dtype.itemsize + b.size * b.dtype.itemsize
                       for w, b in layers)
    act_bytes = 2 * tb * (pdims[0] + pdims[-1]) * 4
    interm_bytes = 2 * tb * max(pdims) * 4
    vmem_limit = int(1.25 * (2 * weight_bytes + act_bytes + interm_bytes)) + (4 << 20)
    vmem_limit = max(16 << 20, min(vmem_limit, 64 << 20))

    def build(use_buffered):
        # Constant index_map => weights/biases are never re-DMA'd across batch
        # tiles; with Buffered(1) they are also only single-buffered in VMEM.
        resident = {"pipeline_mode": pl.Buffered(1)} if use_buffered else {}
        in_specs = [pl.BlockSpec((tb, pdims[0]), lambda i: (i, 0))]
        args = [x_pad]
        for li, (w_pad, bias_pad) in enumerate(layers):
            p_in, p_out = pdims[li], pdims[li + 1]
            args += [w_pad, bias_pad]
            in_specs += [
                pl.BlockSpec((p_in, p_out), lambda i: (0, 0), **resident),
                pl.BlockSpec((1, p_out), lambda i: (0, 0), **resident),
            ]
        call = pl.pallas_call(
            _autoencoder_kernel,
            grid=(b_pad // tb,),
            in_specs=in_specs,
            out_specs=pl.BlockSpec((tb, pdims[-1]), lambda i: (i, 0)),
            out_shape=jax.ShapeDtypeStruct((b_pad, pdims[-1]), jnp.float32),
            compiler_params=pltpu.CompilerParams(
                dimension_semantics=("parallel",),
                vmem_limit_bytes=vmem_limit,
            ),
        )
        return call, args

    try:
        call, args = build(use_buffered=True)
        out = jax.block_until_ready(call(*args))
    except Exception:
        # TODO(synk): pipeline_mode=pl.Buffered(1) rejected by this jax build;
        # fall back to default (double-buffered) resident weights.
        call, args = build(use_buffered=False)
        out = jax.block_until_ready(call(*args))

    return out[:B, :n_out]


# ----------------------------------------------------------------------------
# Deterministic parameter / mask construction (nn.Linear-style init).
# ----------------------------------------------------------------------------
def _init_masked_linear(key, in_features, out_features, mask):
    kw, kb = jax.random.split(key)
    bound = 1.0 / math.sqrt(in_features)
    w = jax.random.uniform(kw, (out_features, in_features),
                           jnp.float32, -bound, bound)
    b = jax.random.uniform(kb, (1, out_features), jnp.float32, -bound, bound)
    assert mask.shape == (out_features, in_features)
    return (w, mask.astype(jnp.float32), b)


def build_autoencoder_params(key, graph_mask, latent_mask):
    # graph_mask : (N, N) metapathway graph mask; latent_mask : (L, N).
    k1, k2, k3, k4 = jax.random.split(key, 4)
    return [
        # encoder.first_layer : MetapathwayGraphEncoder(N, N, graph_mask)
        _init_masked_linear(k1, graph_mask.shape[1], graph_mask.shape[0], graph_mask),
        # encoder.second_layer: MetapathwayToPathwayEncoder(N, L, latent_mask)
        _init_masked_linear(k2, latent_mask.shape[1], latent_mask.shape[0], latent_mask),
        # decoder.first_layer : PathwayToMetapathwayDecoder(L, N, latent_mask.T)
        _init_masked_linear(k3, latent_mask.T.shape[1], latent_mask.T.shape[0], latent_mask.T),
        # decoder.second_layer: MetapathwayGraphDecoder(N, N, graph_mask)
        _init_masked_linear(k4, graph_mask.shape[1], graph_mask.shape[0], graph_mask),
    ]


def reference_forward_f32(x, params):
    """Pure-f32 reference of the PyTorch module."""
    h = x
    for w, m, b in params:
        h = h @ (w * m).T + b[0]
    return h


def reference_forward_bf16(x, params):
    """Reference matching the kernel numerics: bf16 matmul inputs, f32 accum."""
    h = x.astype(jnp.float32)
    for w, m, b in params:
        wt = (w * m).T.astype(jnp.bfloat16)
        h = jnp.dot(h.astype(jnp.bfloat16), wt,
                    preferred_element_type=jnp.float32)
        h = h + jnp.reshape(b, (1, -1)).astype(jnp.float32)
    return h


if __name__ == "__main__":
    key = jax.random.PRNGKey(0)
    k_gmask, k_lmask, k_params, k_x = jax.random.split(key, 4)

    B = 8      # batch
    N = 32     # metapathway graph nodes (graph_mask is N x N)
    L = 16     # latent pathways (latent_mask is L x N)

    graph_mask = (jax.random.uniform(k_gmask, (N, N)) < 0.5).astype(jnp.float32)
    latent_mask = (jax.random.uniform(k_lmask, (L, N)) < 0.5).astype(jnp.float32)

    params = build_autoencoder_params(k_params, graph_mask, latent_mask)
    prepared = prepare_autoencoder_params(params)   # one-time, hoisted prep
    x = jax.random.normal(k_x, (B, N), jnp.float32)

    out = jax.block_until_ready(autoencoder_forward(x, prepared))

    ref = reference_forward_bf16(x, params)
    assert out.shape == (B, N), out.shape
    assert jnp.allclose(out, ref, atol=1e-3, rtol=1e-3), \
        float(jnp.max(jnp.abs(out - ref)))

    print("KERNEL_OK")
</pallas_src>

<mosaic_0001>
module attributes {stable_mosaic.version = 11 : i64} {
  func.func @_autoencoder_kernel(%arg0: i32, %arg1: memref<8x128xf32, #tpu.memory_space<vmem>>, %arg2: memref<128x128xbf16, #tpu.memory_space<vmem>>, %arg3: memref<1x128xf32, #tpu.memory_space<vmem>>, %arg4: memref<128x128xbf16, #tpu.memory_space<vmem>>, %arg5: memref<1x128xf32, #tpu.memory_space<vmem>>, %arg6: memref<128x128xbf16, #tpu.memory_space<vmem>>, %arg7: memref<1x128xf32, #tpu.memory_space<vmem>>, %arg8: memref<128x128xbf16, #tpu.memory_space<vmem>>, %arg9: memref<1x128xf32, #tpu.memory_space<vmem>>, %arg10: memref<8x128xf32, #tpu.memory_space<vmem>>) attributes {dimension_semantics = [#tpu.dimension_semantics<parallel>], iteration_bounds = array<i64: 1>, scalar_prefetch = 0 : i64, scratch_operands = 0 : i64, tpu.core_type = #tpu.core_type<tc>, window_params = [{transform_indices = @transform_0, window_bounds = array<i64: 8, 128>}, {pipeline_mode = #tpu.pipeline_mode<synchronous>, transform_indices = @transform_1, window_bounds = array<i64: 128, 128>}, {pipeline_mode = #tpu.pipeline_mode<synchronous>, transform_indices = @transform_2, window_bounds = array<i64: 1, 128>}, {pipeline_mode = #tpu.pipeline_mode<synchronous>, transform_indices = @transform_3, window_bounds = array<i64: 128, 128>}, {pipeline_mode = #tpu.pipeline_mode<synchronous>, transform_indices = @transform_4, window_bounds = array<i64: 1, 128>}, {pipeline_mode = #tpu.pipeline_mode<synchronous>, transform_indices = @transform_5, window_bounds = array<i64: 128, 128>}, {pipeline_mode = #tpu.pipeline_mode<synchronous>, transform_indices = @transform_6, window_bounds = array<i64: 1, 128>}, {pipeline_mode = #tpu.pipeline_mode<synchronous>, transform_indices = @transform_7, window_bounds = array<i64: 128, 128>}, {pipeline_mode = #tpu.pipeline_mode<synchronous>, transform_indices = @transform_8, window_bounds = array<i64: 1, 128>}, {transform_indices = @transform_9, window_bounds = array<i64: 8, 128>}]} {
    %c0 = arith.constant 0 : index
    %c0_0 = arith.constant 0 : index
    %0 = vector.load %arg1[%c0, %c0_0] : memref<8x128xf32, #tpu.memory_space<vmem>>, vector<8x128xf32>
    %1 = arith.truncf %0 : vector<8x128xf32> to vector<8x128xbf16>
    %c0_1 = arith.constant 0 : index
    %c0_2 = arith.constant 0 : index
    %2 = vector.load %arg2[%c0_1, %c0_2] : memref<128x128xbf16, #tpu.memory_space<vmem>>, vector<128x128xbf16>
    %cst = arith.constant dense<0.000000e+00> : vector<8x128xf32>
    %3 = tpu.matmul %1, %2, %cst {dimension_numbers = #tpu.dot_dimension_numbers<[1], [0], [0], [1], [0, 0, 1, 1], [], []>} : vector<8x128xbf16>, vector<128x128xbf16>, vector<8x128xf32> -> vector<8x128xf32>
    %c0_3 = arith.constant 0 : index
    %c0_4 = arith.constant 0 : index
    %4 = vector.load %arg3[%c0_3, %c0_4] : memref<1x128xf32, #tpu.memory_space<vmem>>, vector<1x128xf32>
    %5 = vector.broadcast %4 : vector<1x128xf32> to vector<8x128xf32>
    %6 = arith.addf %3, %5 : vector<8x128xf32>
    %7 = arith.truncf %6 : vector<8x128xf32> to vector<8x128xbf16>
    %c0_5 = arith.constant 0 : index
    %c0_6 = arith.constant 0 : index
    %8 = vector.load %arg4[%c0_5, %c0_6] : memref<128x128xbf16, #tpu.memory_space<vmem>>, vector<128x128xbf16>
    %cst_7 = arith.constant dense<0.000000e+00> : vector<8x128xf32>
    %9 = tpu.matmul %7, %8, %cst_7 {dimension_numbers = #tpu.dot_dimension_numbers<[1], [0], [0], [1], [0, 0, 1, 1], [], []>} : vector<8x128xbf16>, vector<128x128xbf16>, vector<8x128xf32> -> vector<8x128xf32>
    %c0_8 = arith.constant 0 : index
    %c0_9 = arith.constant 0 : index
    %10 = vector.load %arg5[%c0_8, %c0_9] : memref<1x128xf32, #tpu.memory_space<vmem>>, vector<1x128xf32>
    %11 = vector.broadcast %10 : vector<1x128xf32> to vector<8x128xf32>
    %12 = arith.addf %9, %11 : vector<8x128xf32>
    %13 = arith.truncf %12 : vector<8x128xf32> to vector<8x128xbf16>
    %c0_10 = arith.constant 0 : index
    %c0_11 = arith.constant 0 : index
    %14 = vector.load %arg6[%c0_10, %c0_11] : memref<128x128xbf16, #tpu.memory_space<vmem>>, vector<128x128xbf16>
    %cst_12 = arith.constant dense<0.000000e+00> : vector<8x128xf32>
    %15 = tpu.matmul %13, %14, %cst_12 {dimension_numbers = #tpu.dot_dimension_numbers<[1], [0], [0], [1], [0, 0, 1, 1], [], []>} : vector<8x128xbf16>, vector<128x128xbf16>, vector<8x128xf32> -> vector<8x128xf32>
    %c0_13 = arith.constant 0 : index
    %c0_14 = arith.constant 0 : index
    %16 = vector.load %arg7[%c0_13, %c0_14] : memref<1x128xf32, #tpu.memory_space<vmem>>, vector<1x128xf32>
    %17 = vector.broadcast %16 : vector<1x128xf32> to vector<8x128xf32>
    %18 = arith.addf %15, %17 : vector<8x128xf32>
    %19 = arith.truncf %18 : vector<8x128xf32> to vector<8x128xbf16>
    %c0_15 = arith.constant 0 : index
    %c0_16 = arith.constant 0 : index
    %20 = vector.load %arg8[%c0_15, %c0_16] : memref<128x128xbf16, #tpu.memory_space<vmem>>, vector<128x128xbf16>
    %cst_17 = arith.constant dense<0.000000e+00> : vector<8x128xf32>
    %21 = tpu.matmul %19, %20, %cst_17 {dimension_numbers = #tpu.dot_dimension_numbers<[1], [0], [0], [1], [0, 0, 1, 1], [], []>} : vector<8x128xbf16>, vector<128x128xbf16>, vector<8x128xf32> -> vector<8x128xf32>
    %c0_18 = arith.constant 0 : index
    %c0_19 = arith.constant 0 : index
    %22 = vector.load %arg9[%c0_18, %c0_19] : memref<1x128xf32, #tpu.memory_space<vmem>>, vector<1x128xf32>
    %23 = vector.broadcast %22 : vector<1x128xf32> to vector<8x128xf32>
    %24 = arith.addf %21, %23 : vector<8x128xf32>
    %c0_20 = arith.constant 0 : index
    %c0_21 = arith.constant 0 : index
    %25 = vector.load %arg10[%c0_20, %c0_21] : memref<8x128xf32, #tpu.memory_space<vmem>>, vector<8x128xf32>
    tpu.vector_store %arg10[%c0_20, %c0_21], %24 {strides = array<i32>} : memref<8x128xf32, #tpu.memory_space<vmem>>, vector<8x128xf32>,
    return
  }
  func.func @transform_0(%arg0: i32) -> (i32, i32) {
    %c0_i32 = arith.constant 0 : i32
    %c0_i32_0 = arith.constant 0 : i32
    return %arg0, %c0_i32 : i32, i32
  }
  func.func @transform_1(%arg0: i32) -> (i32, i32) {
    %c0_i32 = arith.constant 0 : i32
    %c0_i32_0 = arith.constant 0 : i32
    %c0_i32_1 = arith.constant 0 : i32
    return %c0_i32, %c0_i32_0 : i32, i32
  }
  func.func @transform_2(%arg0: i32) -> (i32, i32) {
    %c0_i32 = arith.constant 0 : i32
    %c0_i32_0 = arith.constant 0 : i32
    %c0_i32_1 = arith.constant 0 : i32
    return %c0_i32, %c0_i32_0 : i32, i32
  }
  func.func @transform_3(%arg0: i32) -> (i32, i32) {
    %c0_i32 = arith.constant 0 : i32
    %c0_i32_0 = arith.constant 0 : i32
    %c0_i32_1 = arith.constant 0 : i32
    return %c0_i32, %c0_i32_0 : i32, i32
  }
  func.func @transform_4(%arg0: i32) -> (i32, i32) {
    %c0_i32 = arith.constant 0 : i32
    %c0_i32_0 = arith.constant 0 : i32
    %c0_i32_1 = arith.constant 0 : i32
    return %c0_i32, %c0_i32_0 : i32, i32
  }
  func.func @transform_5(%arg0: i32) -> (i32, i32) {
    %c0_i32 = arith.constant 0 : i32
    %c0_i32_0 = arith.constant 0 : i32
    %c0_i32_1 = arith.constant 0 : i32
    return %c0_i32, %c0_i32_0 : i32, i32
  }
  func.func @transform_6(%arg0: i32) -> (i32, i32) {
    %c0_i32 = arith.constant 0 : i32
    %c0_i32_0 = arith.constant 0 : i32
    %c0_i32_1 = arith.constant 0 : i32
    return %c0_i32, %c0_i32_0 : i32, i32
  }
  func.func @transform_7(%arg0: i32) -> (i32, i32) {
    %c0_i32 = arith.constant 0 : i32
    %c0_i32_0 = arith.constant 0 : i32
    %c0_i32_1 = arith.constant 0 : i32
    return %c0_i32, %c0_i32_0 : i32, i32
  }
  func.func @transform_8(%arg0: i32) -> (i32, i32) {
    %c0_i32 = arith.constant 0 : i32
    %c0_i32_0 = arith.constant 0 : i32
    %c0_i32_1 = arith.constant 0 : i32
    return %c0_i32, %c0_i32_0 : i32, i32
  }
  func.func @transform_9(%arg0: i32) -> (i32, i32) {
    %c0_i32 = arith.constant 0 : i32
    %c0_i32_0 = arith.constant 0 : i32
    return %arg0, %c0_i32 : i32, i32
  }
}

module attributes {stable_mosaic.version = 11 : i64} {
  func.func @_autoencoder_kernel(%arg0: i32, %arg1: memref<8x128xf32, #tpu.memory_space<vmem>>, %arg2: memref<128x128xbf16, #tpu.memory_space<vmem>>, %arg3: memref<1x128xf32, #tpu.memory_space<vmem>>, %arg4: memref<128x128xbf16, #tpu.memory_space<vmem>>, %arg5: memref<1x128xf32, #tpu.memory_space<vmem>>, %arg6: memref<128x128xbf16, #tpu.memory_space<vmem>>, %arg7: memref<1x128xf32, #tpu.memory_space<vmem>>, %arg8: memref<128x128xbf16, #tpu.memory_space<vmem>>, %arg9: memref<1x128xf32, #tpu.memory_space<vmem>>, %arg10: memref<8x128xf32, #tpu.memory_space<vmem>>) attributes {dimension_semantics = [#tpu.dimension_semantics<parallel>], iteration_bounds = array<i64: 1>, scalar_prefetch = 0 : i64, scratch_operands = 0 : i64, tpu.core_type = #tpu.core_type<tc>, window_params = [{transform_indices = @transform_0, window_bounds = array<i64: 8, 128>}, {pipeline_mode = #tpu.pipeline_mode<synchronous>, transform_indices = @transform_1, window_bounds = array<i64: 128, 128>}, {pipeline_mode = #tpu.pipeline_mode<synchronous>, transform_indices = @transform_2, window_bounds = array<i64: 1, 128>}, {pipeline_mode = #tpu.pipeline_mode<synchronous>, transform_indices = @transform_3, window_bounds = array<i64: 128, 128>}, {pipeline_mode = #tpu.pipeline_mode<synchronous>, transform_indices = @transform_4, window_bounds = array<i64: 1, 128>}, {pipeline_mode = #tpu.pipeline_mode<synchronous>, transform_indices = @transform_5, window_bounds = array<i64: 128, 128>}, {pipeline_mode = #tpu.pipeline_mode<synchronous>, transform_indices = @transform_6, window_bounds = array<i64: 1, 128>}, {pipeline_mode = #tpu.pipeline_mode<synchronous>, transform_indices = @transform_7, window_bounds = array<i64: 128, 128>}, {pipeline_mode = #tpu.pipeline_mode<synchronous>, transform_indices = @transform_8, window_bounds = array<i64: 1, 128>}, {transform_indices = @transform_9, window_bounds = array<i64: 8, 128>}]} {
    %c0 = arith.constant 0 : index
    %c0_0 = arith.constant 0 : index
    %0 = vector.load %arg1[%c0, %c0_0] : memref<8x128xf32, #tpu.memory_space<vmem>>, vector<8x128xf32>
    %1 = arith.truncf %0 : vector<8x128xf32> to vector<8x128xbf16>
    %c0_1 = arith.constant 0 : index
    %c0_2 = arith.constant 0 : index
    %2 = vector.load %arg2[%c0_1, %c0_2] : memref<128x128xbf16, #tpu.memory_space<vmem>>, vector<128x128xbf16>
    %cst = arith.constant dense<0.000000e+00> : vector<8x128xf32>
    %3 = tpu.matmul %1, %2, %cst {dimension_numbers = #tpu.dot_dimension_numbers<[1], [0], [0], [1], [0, 0, 1, 1], [], []>} : vector<8x128xbf16>, vector<128x128xbf16>, vector<8x128xf32> -> vector<8x128xf32>
    %c0_3 = arith.constant 0 : index
    %c0_4 = arith.constant 0 : index
    %4 = vector.load %arg3[%c0_3, %c0_4] : memref<1x128xf32, #tpu.memory_space<vmem>>, vector<1x128xf32>
    %5 = vector.broadcast %4 : vector<1x128xf32> to vector<8x128xf32>
    %6 = arith.addf %3, %5 : vector<8x128xf32>
    %7 = arith.truncf %6 : vector<8x128xf32> to vector<8x128xbf16>
    %c0_5 = arith.constant 0 : index
    %c0_6 = arith.constant 0 : index
    %8 = vector.load %arg4[%c0_5, %c0_6] : memref<128x128xbf16, #tpu.memory_space<vmem>>, vector<128x128xbf16>
    %cst_7 = arith.constant dense<0.000000e+00> : vector<8x128xf32>
    %9 = tpu.matmul %7, %8, %cst_7 {dimension_numbers = #tpu.dot_dimension_numbers<[1], [0], [0], [1], [0, 0, 1, 1], [], []>} : vector<8x128xbf16>, vector<128x128xbf16>, vector<8x128xf32> -> vector<8x128xf32>
    %c0_8 = arith.constant 0 : index
    %c0_9 = arith.constant 0 : index
    %10 = vector.load %arg5[%c0_8, %c0_9] : memref<1x128xf32, #tpu.memory_space<vmem>>, vector<1x128xf32>
    %11 = vector.broadcast %10 : vector<1x128xf32> to vector<8x128xf32>
    %12 = arith.addf %9, %11 : vector<8x128xf32>
    %13 = arith.truncf %12 : vector<8x128xf32> to vector<8x128xbf16>
    %c0_10 = arith.constant 0 : index
    %c0_11 = arith.constant 0 : index
    %14 = vector.load %arg6[%c0_10, %c0_11] : memref<128x128xbf16, #tpu.memory_space<vmem>>, vector<128x128xbf16>
    %cst_12 = arith.constant dense<0.000000e+00> : vector<8x128xf32>
    %15 = tpu.matmul %13, %14, %cst_12 {dimension_numbers = #tpu.dot_dimension_numbers<[1], [0], [0], [1], [0, 0, 1, 1], [], []>} : vector<8x128xbf16>, vector<128x128xbf16>, vector<8x128xf32> -> vector<8x128xf32>
    %c0_13 = arith.constant 0 : index
    %c0_14 = arith.constant 0 : index
    %16 = vector.load %arg7[%c0_13, %c0_14] : memref<1x128xf32, #tpu.memory_space<vmem>>, vector<1x128xf32>
    %17 = vector.broadcast %16 : vector<1x128xf32> to vector<8x128xf32>
    %18 = arith.addf %15, %17 : vector<8x128xf32>
    %19 = arith.truncf %18 : vector<8x128xf32> to vector<8x128xbf16>
    %c0_15 = arith.constant 0 : index
    %c0_16 = arith.constant 0 : index
    %20 = vector.load %arg8[%c0_15, %c0_16] : memref<128x128xbf16, #tpu.memory_space<vmem>>, vector<128x128xbf16>
    %cst_17 = arith.constant dense<0.000000e+00> : vector<8x128xf32>
    %21 = tpu.matmul %19, %20, %cst_17 {dimension_numbers = #tpu.dot_dimension_numbers<[1], [0], [0], [1], [0, 0, 1, 1], [], []>} : vector<8x128xbf16>, vector<128x128xbf16>, vector<8x128xf32> -> vector<8x128xf32>
    %c0_18 = arith.constant 0 : index
    %c0_19 = arith.constant 0 : index
    %22 = vector.load %arg9[%c0_18, %c0_19] : memref<1x128xf32, #tpu.memory_space<vmem>>, vector<1x128xf32>
    %23 = vector.broadcast %22 : vector<1x128xf32> to vector<8x128xf32>
    %24 = arith.addf %21, %23 : vector<8x128xf32>
    %c0_20 = arith.constant 0 : index
    %c0_21 = arith.constant 0 : index
    %25 = vector.load %arg10[%c0_20, %c0_21] : memref<8x128xf32, #tpu.memory_space<vmem>>, vector<8x128xf32>
    tpu.vector_store %arg10[%c0_20, %c0_21], %24 {strides = array<i32>} : memref<8x128xf32, #tpu.memory_space<vmem>>, vector<8x128xf32>,
    return
  }
  func.func @transform_0(%arg0: i32) -> (i32, i32) {
    %c0_i32 = arith.constant 0 : i32
    %c0_i32_0 = arith.constant 0 : i32
    return %arg0, %c0_i32 : i32, i32
  }
  func.func @transform_1(%arg0: i32) -> (i32, i32) {
    %c0_i32 = arith.constant 0 : i32
    %c0_i32_0 = arith.constant 0 : i32
    %c0_i32_1 = arith.constant 0 : i32
    return %c0_i32, %c0_i32_0 : i32, i32
  }
  func.func @transform_2(%arg0: i32) -> (i32, i32) {
    %c0_i32 = arith.constant 0 : i32
    %c0_i32_0 = arith.constant 0 : i32
    %c0_i32_1 = arith.constant 0 : i32
    return %c0_i32, %c0_i32_0 : i32, i32
  }
  func.func @transform_3(%arg0: i32) -> (i32, i32) {
    %c0_i32 = arith.constant 0 : i32
    %c0_i32_0 = arith.constant 0 : i32
    %c0_i32_1 = arith.constant 0 : i32
    return %c0_i32, %c0_i32_0 : i32, i32
  }
  func.func @transform_4(%arg0: i32) -> (i32, i32) {
    %c0_i32 = arith.constant 0 : i32
    %c0_i32_0 = arith.constant 0 : i32
    %c0_i32_1 = arith.constant 0 : i32
    return %c0_i32, %c0_i32_0 : i32, i32
  }
  func.func @transform_5(%arg0: i32) -> (i32, i32) {
    %c0_i32 = arith.constant 0 : i32
    %c0_i32_0 = arith.constant 0 : i32
    %c0_i32_1 = arith.constant 0 : i32
    return %c0_i32, %c0_i32_0 : i32, i32
  }
  func.func @transform_6(%arg0: i32) -> (i32, i32) {
    %c0_i32 = arith.constant 0 : i32
    %c0_i32_0 = arith.constant 0 : i32
    %c0_i32_1 = arith.constant 0 : i32
    return %c0_i32, %c0_i32_0 : i32, i32
  }
  func.func @transform_7(%arg0: i32) -> (i32, i32) {
    %c0_i32 = arith.constant 0 : i32
    %c0_i32_0 = arith.constant 0 : i32
    %c0_i32_1 = arith.constant 0 : i32
    return %c0_i32, %c0_i32_0 : i32, i32
  }
  func.func @transform_8(%arg0: i32) -> (i32, i32) {
    %c0_i32 = arith.constant 0 : i32
    %c0_i32_0 = arith.constant 0 : i32
    %c0_i32_1 = arith.constant 0 : i32
    return %c0_i32, %c0_i32_0 : i32, i32
  }
  func.func @transform_9(%arg0: i32) -> (i32, i32) {
    %c0_i32 = arith.constant 0 : i32
    %c0_i32_0 = arith.constant 0 : i32
    return %arg0, %c0_i32 : i32, i32
  }
}

</mosaic_0001>

<llo_original>
// kernel: tpu_custom_call.1
$region0: #{tpu_custom_call.1}
  #allocation0 [shape = 'u32[]', space=smem, size = 0x4, offset = 0x4, fixed_abs, tag = 'smem constant byte address 0x4 - core index']
  #allocation1 [shape = 'u32[144,128]{1,0:T(1,128)}', space=vmem, size = 0x12000, scoped, tag = 'internal scratch']
  %s0 = inlined_call_operand.hbm [shape: f32[8,128], index: 0, kind: input, shape index: {}]
  %s1 = inlined_call_operand.hbm [shape: bf16[128,128], index: 1, kind: input, shape index: {}]
  %s2 = inlined_call_operand.vmem [shape: f32[1,128], index: 2, kind: input, shape index: {}]
  %s3 = inlined_call_operand.hbm [shape: bf16[128,128], index: 3, kind: input, shape index: {}]
  %s4 = inlined_call_operand.vmem [shape: f32[1,128], index: 4, kind: input, shape index: {}]
  %s5 = inlined_call_operand.hbm [shape: bf16[128,128], index: 5, kind: input, shape index: {}]
  %s6 = inlined_call_operand.vmem [shape: f32[1,128], index: 6, kind: input, shape index: {}]
  %s7 = inlined_call_operand.hbm [shape: bf16[128,128], index: 7, kind: input, shape index: {}]
  %s8 = inlined_call_operand.vmem [shape: f32[1,128], index: 8, kind: input, shape index: {}]
  %s9 = inlined_call_operand.hbm [shape: f32[8,128], index: 9, kind: output, shape index: {}]
  %s10 = sld [smem:[#allocation0]]
  $region66: #{tpu_custom_call.1} parent=0
    _
  %s12 = ssub.s32 1, %s10
  %s13 = scalar_select 0, %s12, %s10
  $region1: #{tpu_custom_call.1} parent=0
    #allocation2 [shape = 'u8[4096]{0}', space=vmem, size = 0x1000, scoped, tag = 'input window, operand 0, single buffered']
    #allocation3 [shape = 's32[1]{0}', space=sflag, size = 0x4, scoped, tag = 'scoped memory for tpu_custom_call.1']
    #allocation4 [shape = 's32[1]{0}', space=sflag, size = 0x4, scoped, tag = 'scoped memory for tpu_custom_call.1']
    #allocation5 [shape = 'u8[32768]{0}', space=vmem, size = 0x8000, scoped, tag = 'input window, operand 1, single buffered']
    #allocation6 [shape = 's32[1]{0}', space=sflag, size = 0x4, scoped, tag = 'scoped memory for tpu_custom_call.1']
    #allocation7 [shape = 'u8[32768]{0}', space=vmem, size = 0x8000, scoped, tag = 'input window, operand 3, single buffered']
    #allocation8 [shape = 'u8[32768]{0}', space=vmem, size = 0x8000, scoped, tag = 'input window, operand 5, single buffered']
    #allocation9 [shape = 's32[1]{0}', space=sflag, size = 0x4, scoped, tag = 'scoped memory for tpu_custom_call.1']
    #allocation10 [shape = 'u8[32768]{0}', space=vmem, size = 0x8000, scoped, tag = 'input window, operand 7, single buffered']
    #allocation11 [shape = 'u8[4096]{0}', space=vmem, size = 0x1000, scoped, tag = 'output window, operand 0, single buffered']
    %14 = vsyncpa [#allocation3], 0
    %15 = vsyncpa [#allocation6], 0
    %16 = vsyncpa [#allocation9], 0
    %17 = vsyncpa [#allocation4], 0
    // Predicated region
    $region2: #{tpu_custom_call.1} parent=1 // pred_check
      _
    $region3: #{tpu_custom_call.1} parent=1 // pred_check_branch
      %19 = sbr.rel (0) target = $region5
    $region4: #{tpu_custom_call.1} parent=1 // pred_region
      %s21 = ssub.s32 128, 128
      %22 = vsyncadd [#allocation3], %s21
      %s24 = sshll.u32 [#allocation2], 4
      %s25 = int_to_ptr.vmem [resolvable:$true] %s24
      %27 = dma.hbm_to_vmem [thread:$0]  %s0, 128, %s25, [#allocation3]
    $region5: #{tpu_custom_call.1} parent=1 // pred_fallthru
      _
    // Predicated region
    $region6: #{tpu_custom_call.1} parent=1 // pred_check
      _
    $region7: #{tpu_custom_call.1} parent=1 // pred_check_branch
      %29 = sbr.rel (0) target = $region9
    $region8: #{tpu_custom_call.1} parent=1 // pred_region
      %s31 = ssub.s32 1024, 1024
      %32 = vsyncadd [#allocation6], %s31
      %s33 = sshll.u32 [#allocation5], 4
      %s34 = int_to_ptr.vmem [resolvable:$true] %s33
      %39 = dma.hbm_to_vmem [thread:$0]  %s1, 1024, %s34, [#allocation6], 64, 64, 4
    $region9: #{tpu_custom_call.1} parent=1 // pred_fallthru
      _
    // Predicated region
    $region10: #{tpu_custom_call.1} parent=1 // pred_check
      _
    $region11: #{tpu_custom_call.1} parent=1 // pred_check_branch
      %41 = sbr.rel (0) target = $region13
    $region12: #{tpu_custom_call.1} parent=1 // pred_region
      _
    $region13: #{tpu_custom_call.1} parent=1 // pred_fallthru
      _
    // Predicated region
    $region14: #{tpu_custom_call.1} parent=1 // pred_check
      _
    $region15: #{tpu_custom_call.1} parent=1 // pred_check_branch
      %43 = sbr.rel (0) target = $region17
    $region16: #{tpu_custom_call.1} parent=1 // pred_region
      %s45 = ssub.s32 1024, 1024
      %46 = vsyncadd [#allocation6], %s45
      %s47 = sshll.u32 [#allocation7], 4
      %s48 = int_to_ptr.vmem [resolvable:$true] %s47
      %53 = dma.hbm_to_vmem [thread:$0]  %s3, 1024, %s48, [#allocation6], 64, 64, 4
    $region17: #{tpu_custom_call.1} parent=1 // pred_fallthru
      _
    // Predicated region
    $region18: #{tpu_custom_call.1} parent=1 // pred_check
      _
    $region19: #{tpu_custom_call.1} parent=1 // pred_check_branch
      %55 = sbr.rel (0) target = $region21
    $region20: #{tpu_custom_call.1} parent=1 // pred_region
      _
    $region21: #{tpu_custom_call.1} parent=1 // pred_fallthru
      _
    // Predicated region
    $region22: #{tpu_custom_call.1} parent=1 // pred_check
      _
    $region23: #{tpu_custom_call.1} parent=1 // pred_check_branch
      %57 = sbr.rel (0) target = $region25
    $region24: #{tpu_custom_call.1} parent=1 // pred_region
      %s59 = ssub.s32 1024, 1024
      %60 = vsyncadd [#allocation9], %s59
      %s61 = sshll.u32 [#allocation8], 4
      %s62 = int_to_ptr.vmem [resolvable:$true] %s61
      %67 = dma.hbm_to_vmem [thread:$0]  %s5, 1024, %s62, [#allocation9], 64, 64, 4
    $region25: #{tpu_custom_call.1} parent=1 // pred_fallthru
      _
    // Predicated region
    $region26: #{tpu_custom_call.1} parent=1 // pred_check
      _
    $region27: #{tpu_custom_call.1} parent=1 // pred_check_branch
      %69 = sbr.rel (0) target = $region29
    $region28: #{tpu_custom_call.1} parent=1 // pred_region
      _
    $region29: #{tpu_custom_call.1} parent=1 // pred_fallthru
      _
    // Predicated region
    $region30: #{tpu_custom_call.1} parent=1 // pred_check
      _
    $region31: #{tpu_custom_call.1} parent=1 // pred_check_branch
      %71 = sbr.rel (0) target = $region33
    $region32: #{tpu_custom_call.1} parent=1 // pred_region
      %s73 = ssub.s32 1024, 1024
      %74 = vsyncadd [#allocation9], %s73
      %s75 = sshll.u32 [#allocation10], 4
      %s76 = int_to_ptr.vmem [resolvable:$true] %s75
      %81 = dma.hbm_to_vmem [thread:$0]  %s7, 1024, %s76, [#allocation9], 64, 64, 4
    $region33: #{tpu_custom_call.1} parent=1 // pred_fallthru
      _
    // Predicated region
    $region34: #{tpu_custom_call.1} parent=1 // pred_check
      _
    $region35: #{tpu_custom_call.1} parent=1 // pred_check_branch
      %83 = sbr.rel (0) target = $region37
    $region36: #{tpu_custom_call.1} parent=1 // pred_region
      _
    $region37: #{tpu_custom_call.1} parent=1 // pred_fallthru
      _
    // Predicated region
    $region38: #{tpu_custom_call.1} parent=1 // pred_check
      _
    $region39: #{tpu_custom_call.1} parent=1 // pred_check_branch
      %85 = sbr.rel (0) target = $region41
    $region40: #{tpu_custom_call.1} parent=1 // pred_region
      %86 = dma.done [#allocation3], 128
    $region41: #{tpu_custom_call.1} parent=1 // pred_fallthru
      _
    // Predicated region
    $region42: #{tpu_custom_call.1} parent=1 // pred_check
      _
    $region43: #{tpu_custom_call.1} parent=1 // pred_check_branch
      %88 = sbr.rel (0) target = $region45
    $region44: #{tpu_custom_call.1} parent=1 // pred_region
      %89 = dma.done [#allocation6], 1024
    $region45: #{tpu_custom_call.1} parent=1 // pred_fallthru
      _
    // Predicated region
    $region46: #{tpu_custom_call.1} parent=1 // pred_check
      _
    $region47: #{tpu_custom_call.1} parent=1 // pred_check_branch
      %91 = sbr.rel (0) target = $region49
    $region48: #{tpu_custom_call.1} parent=1 // pred_region
      %92 = dma.done [#allocation6], 1024
    $region49: #{tpu_custom_call.1} parent=1 // pred_fallthru
      _
    // Predicated region
    $region50: #{tpu_custom_call.1} parent=1 // pred_check
      _
    $region51: #{tpu_custom_call.1} parent=1 // pred_check_branch
      %94 = sbr.rel (0) target = $region53
    $region52: #{tpu_custom_call.1} parent=1 // pred_region
      %95 = dma.done [#allocation9], 1024
    $region53: #{tpu_custom_call.1} parent=1 // pred_fallthru
      _
    // Predicated region
    $region54: #{tpu_custom_call.1} parent=1 // pred_check
      _
    $region55: #{tpu_custom_call.1} parent=1 // pred_check_branch
      %97 = sbr.rel (0) target = $region57
    $region56: #{tpu_custom_call.1} parent=1 // pred_region
      %98 = dma.done [#allocation9], 1024
    $region57: #{tpu_custom_call.1} parent=1 // pred_fallthru
      _
    %v100 = vld [vmem:[#allocation2] sm:$0xff]
    %v101 = vpack.c.bf16 %v100, %v100
    %v102 = vld [vmem:[#allocation5] sm:$0xf]
    %v103 = vld [vmem:[#allocation5 + $0x4] sm:$0xf]
    %v104 = vld [vmem:[#allocation5 + $0x8] sm:$0xf]
    %v105 = vld [vmem:[#allocation5 + $0xc] sm:$0xf]
    %v106 = vld [vmem:[#allocation5 + $0x10] sm:$0xf]
    %v107 = vld [vmem:[#allocation5 + $0x14] sm:$0xf]
    %v108 = vld [vmem:[#allocation5 + $0x18] sm:$0xf]
    %v109 = vld [vmem:[#allocation5 + $0x1c] sm:$0xf]
    %v110 = vld [vmem:[#allocation5 + $0x20] sm:$0xf]
    %v111 = vld [vmem:[#allocation5 + $0x24] sm:$0xf]
    %v112 = vld [vmem:[#allocation5 + $0x28] sm:$0xf]
    %v113 = vld [vmem:[#allocation5 + $0x2c] sm:$0xf]
    %v114 = vld [vmem:[#allocation5 + $0x30] sm:$0xf]
    %v115 = vld [vmem:[#allocation5 + $0x34] sm:$0xf]
    %v116 = vld [vmem:[#allocation5 + $0x38] sm:$0xf]
    %v117 = vld [vmem:[#allocation5 + $0x3c] sm:$0xf]
    %v118 = vld [vmem:[%s2] sm:$0x1]
    %v120 = vlaneseq
    %v121 = vshrl.u32 %v120, 7
    %v122 = vsub.s32 0, %v121
    %v123 = vrot.slane %v118, %v122
    %v141 = vunpack.c.l.b16 %v102
    %v142 = vunpack.c.l.b16 %v103
    %v143 = vunpack.c.l.b16 %v104
    %v144 = vunpack.c.l.b16 %v105
    %v145 = vunpack.c.l.b16 %v106
    %v146 = vunpack.c.l.b16 %v107
    %v147 = vunpack.c.l.b16 %v108
    %v148 = vunpack.c.l.b16 %v109
    %v149 = vunpack.c.l.b16 %v110
    %v150 = vunpack.c.l.b16 %v111
    %v151 = vunpack.c.l.b16 %v112
    %v152 = vunpack.c.l.b16 %v113
    %v153 = vunpack.c.l.b16 %v114
    %v154 = vunpack.c.l.b16 %v115
    %v155 = vunpack.c.l.b16 %v116
    %v156 = vunpack.c.l.b16 %v117
    %v157 = vpack.c.b16 %v142, %v141
    %v158 = vpack.c.b16 %v144, %v143
    %v159 = vpack.c.b16 %v146, %v145
    %v160 = vpack.c.b16 %v148, %v147
    %v161 = vpack.c.b16 %v150, %v149
    %v162 = vpack.c.b16 %v152, %v151
    %v163 = vpack.c.b16 %v154, %v153
    %v164 = vpack.c.b16 %v156, %v155
    %173 = vmatprep.subr.bf16.mxu0 0
    %174 = vmatpush1.bf16.msra.mxu0 %v157
    %175 = vmatprep.subr.bf16.mxu0 0
    %176 = vmatpush1.bf16.msra.mxu0 %v158
    %177 = vmatprep.subr.bf16.mxu0 0
    %178 = vmatpush1.bf16.msra.mxu0 %v159
    %179 = vmatprep.subr.bf16.mxu0 0
    %180 = vmatpush1.bf16.msra.mxu0 %v160
    %181 = vmatprep.subr.bf16.mxu0 0
    %182 = vmatpush1.bf16.msra.mxu0 %v161
    %183 = vmatprep.subr.bf16.mxu0 0
    %184 = vmatpush1.bf16.msra.mxu0 %v162
    %185 = vmatprep.subr.bf16.mxu0 0
    %186 = vmatpush1.bf16.msra.mxu0 %v163
    %187 = vmatprep.subr.bf16.mxu0 0
    %188 = vmatpush1.bf16.msra.mxu0 %v164
    %189 = vmatprep.subr.bf16.mxu0 0
    %190 = vmatpush1.bf16.msra.mxu0 0
    %191 = vmatprep.subr.bf16.mxu0 0
    %192 = vmatpush1.bf16.msra.mxu0 0
    %193 = vmatprep.subr.bf16.mxu0 0
    %194 = vmatpush1.bf16.msra.mxu0 0
    %195 = vmatprep.subr.bf16.mxu0 0
    %196 = vmatpush1.bf16.msra.mxu0 0
    %197 = vmatprep.subr.bf16.mxu0 0
    %198 = vmatpush1.bf16.msra.mxu0 0
    %199 = vmatprep.subr.bf16.mxu0 0
    %200 = vmatpush1.bf16.msra.mxu0 0
    %201 = vmatprep.subr.bf16.mxu0 0
    %202 = vmatpush1.bf16.msra.mxu0 0
    %203 = vmatprep.subr.bf16.mxu0 0
    %204 = vmatpush1.bf16.msra.mxu0 0
    %205 = vmatprep.mubr.bf16.mxu0 0
    %206 = vmatmul.mubr.bf16.gmra.mrb[0].mxu0 %v101
    %v207 = vpop.f32.mrb[0].mxu0
    %v208 = vadd.f32 %v123, %v207
    %v209 = vpop.f32.mrb[0].mxu0
    %v210 = vpop.f32.mrb[0].mxu0
    %v211 = vpop.f32.mrb[0].mxu0
    %212 = vdwg.mxu0
    %v213 = vpack.c.bf16 %v208, %v208
    %v214 = vld [vmem:[#allocation7] sm:$0xf]
    %v215 = vld [vmem:[#allocation7 + $0x4] sm:$0xf]
    %v216 = vld [vmem:[#allocation7 + $0x8] sm:$0xf]
    %v217 = vld [vmem:[#allocation7 + $0xc] sm:$0xf]
    %v218 = vld [vmem:[#allocation7 + $0x10] sm:$0xf]
    %v219 = vld [vmem:[#allocation7 + $0x14] sm:$0xf]
    %v220 = vld [vmem:[#allocation7 + $0x18] sm:$0xf]
    %v221 = vld [vmem:[#allocation7 + $0x1c] sm:$0xf]
    %v222 = vld [vmem:[#allocation7 + $0x20] sm:$0xf]
    %v223 = vld [vmem:[#allocation7 + $0x24] sm:$0xf]
    %v224 = vld [vmem:[#allocation7 + $0x28] sm:$0xf]
    %v225 = vld [vmem:[#allocation7 + $0x2c] sm:$0xf]
    %v226 = vld [vmem:[#allocation7 + $0x30] sm:$0xf]
    %v227 = vld [vmem:[#allocation7 + $0x34] sm:$0xf]
    %v228 = vld [vmem:[#allocation7 + $0x38] sm:$0xf]
    %v229 = vld [vmem:[#allocation7 + $0x3c] sm:$0xf]
    %v230 = vld [vmem:[%s4] sm:$0x1]
    %v232 = vlaneseq
    %v233 = vshrl.u32 %v232, 7
    %v234 = vsub.s32 0, %v233
    %v235 = vrot.slane %v230, %v234
    %v253 = vunpack.c.l.b16 %v214
    %v254 = vunpack.c.l.b16 %v215
    %v255 = vunpack.c.l.b16 %v216
    %v256 = vunpack.c.l.b16 %v217
    %v257 = vunpack.c.l.b16 %v218
    %v258 = vunpack.c.l.b16 %v219
    %v259 = vunpack.c.l.b16 %v220
    %v260 = vunpack.c.l.b16 %v221
    %v261 = vunpack.c.l.b16 %v222
    %v262 = vunpack.c.l.b16 %v223
    %v263 = vunpack.c.l.b16 %v224
    %v264 = vunpack.c.l.b16 %v225
    %v265 = vunpack.c.l.b16 %v226
    %v266 = vunpack.c.l.b16 %v227
    %v267 = vunpack.c.l.b16 %v228
    %v268 = vunpack.c.l.b16 %v229
    %v269 = vpack.c.b16 %v254, %v253
    %v270 = vpack.c.b16 %v256, %v255
    %v271 = vpack.c.b16 %v258, %v257
    %v272 = vpack.c.b16 %v260, %v259
    %v273 = vpack.c.b16 %v262, %v261
    %v274 = vpack.c.b16 %v264, %v263
    %v275 = vpack.c.b16 %v266, %v265
    %v276 = vpack.c.b16 %v268, %v267
    %285 = vmatprep.subr.bf16.mxu0 0
    %286 = vmatpush1.bf16.msra.mxu0 %v269
    %287 = vmatprep.subr.bf16.mxu0 0
    %288 = vmatpush1.bf16.msra.mxu0 %v270
    %289 = vmatprep.subr.bf16.mxu0 0
    %290 = vmatpush1.bf16.msra.mxu0 %v271
    %291 = vmatprep.subr.bf16.mxu0 0
    %292 = vmatpush1.bf16.msra.mxu0 %v272
    %293 = vmatprep.subr.bf16.mxu0 0
    %294 = vmatpush1.bf16.msra.mxu0 %v273
    %295 = vmatprep.subr.bf16.mxu0 0
    %296 = vmatpush1.bf16.msra.mxu0 %v274
    %297 = vmatprep.subr.bf16.mxu0 0
    %298 = vmatpush1.bf16.msra.mxu0 %v275
    %299 = vmatprep.subr.bf16.mxu0 0
    %300 = vmatpush1.bf16.msra.mxu0 %v276
    %301 = vmatprep.subr.bf16.mxu0 0
    %302 = vmatpush1.bf16.msra.mxu0 0
    %303 = vmatprep.subr.bf16.mxu0 0
    %304 = vmatpush1.bf16.msra.mxu0 0
    %305 = vmatprep.subr.bf16.mxu0 0
    %306 = vmatpush1.bf16.msra.mxu0 0
    %307 = vmatprep.subr.bf16.mxu0 0
    %308 = vmatpush1.bf16.msra.mxu0 0
    %309 = vmatprep.subr.bf16.mxu0 0
    %310 = vmatpush1.bf16.msra.mxu0 0
    %311 = vmatprep.subr.bf16.mxu0 0
    %312 = vmatpush1.bf16.msra.mxu0 0
    %313 = vmatprep.subr.bf16.mxu0 0
    %314 = vmatpush1.bf16.msra.mxu0 0
    %315 = vmatprep.subr.bf16.mxu0 0
    %316 = vmatpush1.bf16.msra.mxu0 0
    %317 = vmatprep.mubr.bf16.mxu0 0
    %318 = vmatmul.mubr.bf16.gmra.mrb[0].mxu0 %v213
    %v319 = vpop.f32.mrb[0].mxu0
    %v320 = vadd.f32 %v235, %v319
    %v321 = vpop.f32.mrb[0].mxu0
    %v322 = vpop.f32.mrb[0].mxu0
    %v323 = vpop.f32.mrb[0].mxu0
    %324 = vdwg.mxu0
    %v325 = vpack.c.bf16 %v320, %v320
    %v326 = vld [vmem:[#allocation8] sm:$0xf]
    %v327 = vld [vmem:[#allocation8 + $0x4] sm:$0xf]
    %v328 = vld [vmem:[#allocation8 + $0x8] sm:$0xf]
    %v329 = vld [vmem:[#allocation8 + $0xc] sm:$0xf]
    %v330 = vld [vmem:[#allocation8 + $0x10] sm:$0xf]
    %v331 = vld [vmem:[#allocation8 + $0x14] sm:$0xf]
    %v332 = vld [vmem:[#allocation8 + $0x18] sm:$0xf]
    %v333 = vld [vmem:[#allocation8 + $0x1c] sm:$0xf]
    %v334 = vld [vmem:[#allocation8 + $0x20] sm:$0xf]
    %v335 = vld [vmem:[#allocation8 + $0x24] sm:$0xf]
    %v336 = vld [vmem:[#allocation8 + $0x28] sm:$0xf]
    %v337 = vld [vmem:[#allocation8 + $0x2c] sm:$0xf]
    %v338 = vld [vmem:[#allocation8 + $0x30] sm:$0xf]
    %v339 = vld [vmem:[#allocation8 + $0x34] sm:$0xf]
    %v340 = vld [vmem:[#allocation8 + $0x38] sm:$0xf]
    %v341 = vld [vmem:[#allocation8 + $0x3c] sm:$0xf]
    %v342 = vld [vmem:[%s6] sm:$0x1]
    %v344 = vlaneseq
    %v345 = vshrl.u32 %v344, 7
    %v346 = vsub.s32 0, %v345
    %v347 = vrot.slane %v342, %v346
    %v365 = vunpack.c.l.b16 %v326
    %v366 = vunpack.c.l.b16 %v327
    %v367 = vunpack.c.l.b16 %v328
    %v368 = vunpack.c.l.b16 %v329
    %v369 = vunpack.c.l.b16 %v330
    %v370 = vunpack.c.l.b16 %v331
    %v371 = vunpack.c.l.b16 %v332
    %v372 = vunpack.c.l.b16 %v333
    %v373 = vunpack.c.l.b16 %v334
    %v374 = vunpack.c.l.b16 %v335
    %v375 = vunpack.c.l.b16 %v336
    %v376 = vunpack.c.l.b16 %v337
    %v377 = vunpack.c.l.b16 %v338
    %v378 = vunpack.c.l.b16 %v339
    %v379 = vunpack.c.l.b16 %v340
    %v380 = vunpack.c.l.b16 %v341
    %v381 = vpack.c.b16 %v366, %v365
    %v382 = vpack.c.b16 %v368, %v367
    %v383 = vpack.c.b16 %v370, %v369
    %v384 = vpack.c.b16 %v372, %v371
    %v385 = vpack.c.b16 %v374, %v373
    %v386 = vpack.c.b16 %v376, %v375
    %v387 = vpack.c.b16 %v378, %v377
    %v388 = vpack.c.b16 %v380, %v379
    %397 = vmatprep.subr.bf16.mxu0 0
    %398 = vmatpush1.bf16.msra.mxu0 %v381
    %399 = vmatprep.subr.bf16.mxu0 0
    %400 = vmatpush1.bf16.msra.mxu0 %v382
    %401 = vmatprep.subr.bf16.mxu0 0
    %402 = vmatpush1.bf16.msra.mxu0 %v383
    %403 = vmatprep.subr.bf16.mxu0 0
    %404 = vmatpush1.bf16.msra.mxu0 %v384
    %405 = vmatprep.subr.bf16.mxu0 0
    %406 = vmatpush1.bf16.msra.mxu0 %v385
    %407 = vmatprep.subr.bf16.mxu0 0
    %408 = vmatpush1.bf16.msra.mxu0 %v386
    %409 = vmatprep.subr.bf16.mxu0 0
    %410 = vmatpush1.bf16.msra.mxu0 %v387
    %411 = vmatprep.subr.bf16.mxu0 0
    %412 = vmatpush1.bf16.msra.mxu0 %v388
    %413 = vmatprep.subr.bf16.mxu0 0
    %414 = vmatpush1.bf16.msra.mxu0 0
    %415 = vmatprep.subr.bf16.mxu0 0
    %416 = vmatpush1.bf16.msra.mxu0 0
    %417 = vmatprep.subr.bf16.mxu0 0
    %418 = vmatpush1.bf16.msra.mxu0 0
    %419 = vmatprep.subr.bf16.mxu0 0
    %420 = vmatpush1.bf16.msra.mxu0 0
    %421 = vmatprep.subr.bf16.mxu0 0
    %422 = vmatpush1.bf16.msra.mxu0 0
    %423 = vmatprep.subr.bf16.mxu0 0
    %424 = vmatpush1.bf16.msra.mxu0 0
    %425 = vmatprep.subr.bf16.mxu0 0
    %426 = vmatpush1.bf16.msra.mxu0 0
    %427 = vmatprep.subr.bf16.mxu0 0
    %428 = vmatpush1.bf16.msra.mxu0 0
    %429 = vmatprep.mubr.bf16.mxu0 0
    %430 = vmatmul.mubr.bf16.gmra.mrb[0].mxu0 %v325
    %v431 = vpop.f32.mrb[0].mxu0
    %v432 = vadd.f32 %v347, %v431
    %v433 = vpop.f32.mrb[0].mxu0
    %v434 = vpop.f32.mrb[0].mxu0
    %v435 = vpop.f32.mrb[0].mxu0
    %436 = vdwg.mxu0
    %v437 = vpack.c.bf16 %v432, %v432
    %v438 = vld [vmem:[#allocation10] sm:$0xf]
    %v439 = vld [vmem:[#allocation10 + $0x4] sm:$0xf]
    %v440 = vld [vmem:[#allocation10 + $0x8] sm:$0xf]
    %v441 = vld [vmem:[#allocation10 + $0xc] sm:$0xf]
    %v442 = vld [vmem:[#allocation10 + $0x10] sm:$0xf]
    %v443 = vld [vmem:[#allocation10 + $0x14] sm:$0xf]
    %v444 = vld [vmem:[#allocation10 + $0x18] sm:$0xf]
    %v445 = vld [vmem:[#allocation10 + $0x1c] sm:$0xf]
    %v446 = vld [vmem:[#allocation10 + $0x20] sm:$0xf]
    %v447 = vld [vmem:[#allocation10 + $0x24] sm:$0xf]
    %v448 = vld [vmem:[#allocation10 + $0x28] sm:$0xf]
    %v449 = vld [vmem:[#allocation10 + $0x2c] sm:$0xf]
    %v450 = vld [vmem:[#allocation10 + $0x30] sm:$0xf]
    %v451 = vld [vmem:[#allocation10 + $0x34] sm:$0xf]
    %v452 = vld [vmem:[#allocation10 + $0x38] sm:$0xf]
    %v453 = vld [vmem:[#allocation10 + $0x3c] sm:$0xf]
    %v454 = vld [vmem:[%s8] sm:$0x1]
    %v456 = vlaneseq
    %v457 = vshrl.u32 %v456, 7
    %v458 = vsub.s32 0, %v457
    %v459 = vrot.slane %v454, %v458
    %v477 = vunpack.c.l.b16 %v438
    %v478 = vunpack.c.l.b16 %v439
    %v479 = vunpack.c.l.b16 %v440
    %v480 = vunpack.c.l.b16 %v441
    %v481 = vunpack.c.l.b16 %v442
    %v482 = vunpack.c.l.b16 %v443
    %v483 = vunpack.c.l.b16 %v444
    %v484 = vunpack.c.l.b16 %v445
    %v485 = vunpack.c.l.b16 %v446
    %v486 = vunpack.c.l.b16 %v447
    %v487 = vunpack.c.l.b16 %v448
    %v488 = vunpack.c.l.b16 %v449
    %v489 = vunpack.c.l.b16 %v450
    %v490 = vunpack.c.l.b16 %v451
    %v491 = vunpack.c.l.b16 %v452
    %v492 = vunpack.c.l.b16 %v453
    %v493 = vpack.c.b16 %v478, %v477
    %v494 = vpack.c.b16 %v480, %v479
    %v495 = vpack.c.b16 %v482, %v481
    %v496 = vpack.c.b16 %v484, %v483
    %v497 = vpack.c.b16 %v486, %v485
    %v498 = vpack.c.b16 %v488, %v487
    %v499 = vpack.c.b16 %v490, %v489
    %v500 = vpack.c.b16 %v492, %v491
    %509 = vmatprep.subr.bf16.mxu0 0
    %510 = vmatpush1.bf16.msra.mxu0 %v493
    %511 = vmatprep.subr.bf16.mxu0 0
    %512 = vmatpush1.bf16.msra.mxu0 %v494
    %513 = vmatprep.subr.bf16.mxu0 0
    %514 = vmatpush1.bf16.msra.mxu0 %v495
    %515 = vmatprep.subr.bf16.mxu0 0
    %516 = vmatpush1.bf16.msra.mxu0 %v496
    %517 = vmatprep.subr.bf16.mxu0 0
    %518 = vmatpush1.bf16.msra.mxu0 %v497
    %519 = vmatprep.subr.bf16.mxu0 0
    %520 = vmatpush1.bf16.msra.mxu0 %v498
    %521 = vmatprep.subr.bf16.mxu0 0
    %522 = vmatpush1.bf16.msra.mxu0 %v499
    %523 = vmatprep.subr.bf16.mxu0 0
    %524 = vmatpush1.bf16.msra.mxu0 %v500
    %525 = vmatprep.subr.bf16.mxu0 0
    %526 = vmatpush1.bf16.msra.mxu0 0
    %527 = vmatprep.subr.bf16.mxu0 0
    %528 = vmatpush1.bf16.msra.mxu0 0
    %529 = vmatprep.subr.bf16.mxu0 0
    %530 = vmatpush1.bf16.msra.mxu0 0
    %531 = vmatprep.subr.bf16.mxu0 0
    %532 = vmatpush1.bf16.msra.mxu0 0
    %533 = vmatprep.subr.bf16.mxu0 0
    %534 = vmatpush1.bf16.msra.mxu0 0
    %535 = vmatprep.subr.bf16.mxu0 0
    %536 = vmatpush1.bf16.msra.mxu0 0
    %537 = vmatprep.subr.bf16.mxu0 0
    %538 = vmatpush1.bf16.msra.mxu0 0
    %539 = vmatprep.subr.bf16.mxu0 0
    %540 = vmatpush1.bf16.msra.mxu0 0
    %541 = vmatprep.mubr.bf16.mxu0 0
    %542 = vmatmul.mubr.bf16.gmra.mrb[0].mxu0 %v437
    %v543 = vpop.f32.mrb[0].mxu0
    %v544 = vadd.f32 %v459, %v543
    %v545 = vpop.f32.mrb[0].mxu0
    %v546 = vpop.f32.mrb[0].mxu0
    %v547 = vpop.f32.mrb[0].mxu0
    %548 = vdwg.mxu0
    %549 = vst [vmem:[#allocation11] sm:$0xff] %v544
    // Predicated region
    $region58: #{tpu_custom_call.1} parent=1 // pred_check
      _
    $region59: #{tpu_custom_call.1} parent=1 // pred_check_branch
      %551 = sbr.rel (0) target = $region61
    $region60: #{tpu_custom_call.1} parent=1 // pred_region
      %s553 = ssub.s32 128, 128
      %554 = vsyncadd [#allocation4], %s553
      %s556 = sshll.u32 [#allocation11], 4
      %s557 = int_to_ptr.vmem [resolvable:$true] %s556
      %559 = dma.vmem_to_hbm [thread:$0]  %s557, 128, %s9, [#allocation4]
    $region61: #{tpu_custom_call.1} parent=1 // pred_fallthru
      _
    // Predicated region
    $region62: #{tpu_custom_call.1} parent=1 // pred_check
      _
    $region63: #{tpu_custom_call.1} parent=1 // pred_check_branch
      %561 = sbr.rel (0) target = $region65
    $region64: #{tpu_custom_call.1} parent=1 // pred_region
      %562 = dma.done [#allocation4], 128
    $region65: #{tpu_custom_call.1} parent=1 // pred_fallthru
      _
    %563 = vsyncpa [#allocation3], 1
    %564 = vsyncpa [#allocation6], 1
    %565 = vsyncpa [#allocation9], 1
    %566 = vsyncpa [#allocation4], 1

// kernel: tpu_custom_call.1
$region0: #{tpu_custom_call.1}
  #allocation0 [shape = 'u32[]', space=smem, size = 0x4, offset = 0x4, fixed_abs, tag = 'smem constant byte address 0x4 - core index']
  #allocation1 [shape = 'u32[144,128]{1,0:T(1,128)}', space=vmem, size = 0x12000, scoped, tag = 'internal scratch']
  %s0 = inlined_call_operand.hbm [shape: f32[8,128], index: 0, kind: input, shape index: {}]
  %s1 = inlined_call_operand.hbm [shape: bf16[128,128], index: 1, kind: input, shape index: {}]
  %s2 = inlined_call_operand.vmem [shape: f32[1,128], index: 2, kind: input, shape index: {}]
  %s3 = inlined_call_operand.hbm [shape: bf16[128,128], index: 3, kind: input, shape index: {}]
  %s4 = inlined_call_operand.vmem [shape: f32[1,128], index: 4, kind: input, shape index: {}]
  %s5 = inlined_call_operand.hbm [shape: bf16[128,128], index: 5, kind: input, shape index: {}]
  %s6 = inlined_call_operand.vmem [shape: f32[1,128], index: 6, kind: input, shape index: {}]
  %s7 = inlined_call_operand.hbm [shape: bf16[128,128], index: 7, kind: input, shape index: {}]
  %s8 = inlined_call_operand.vmem [shape: f32[1,128], index: 8, kind: input, shape index: {}]
  %s9 = inlined_call_operand.hbm [shape: f32[8,128], index: 9, kind: output, shape index: {}]
  %s10 = sld [smem:[#allocation0]]
  $region66: #{tpu_custom_call.1} parent=0
    _
  %s12 = ssub.s32 1, %s10
  %s13 = scalar_select 0, %s12, %s10
  $region1: #{tpu_custom_call.1} parent=0
    #allocation2 [shape = 'u8[4096]{0}', space=vmem, size = 0x1000, scoped, tag = 'input window, operand 0, single buffered']
    #allocation3 [shape = 's32[1]{0}', space=sflag, size = 0x4, scoped, tag = 'scoped memory for tpu_custom_call.1']
    #allocation4 [shape = 's32[1]{0}', space=sflag, size = 0x4, scoped, tag = 'scoped memory for tpu_custom_call.1']
    #allocation5 [shape = 'u8[32768]{0}', space=vmem, size = 0x8000, scoped, tag = 'input window, operand 1, single buffered']
    #allocation6 [shape = 's32[1]{0}', space=sflag, size = 0x4, scoped, tag = 'scoped memory for tpu_custom_call.1']
    #allocation7 [shape = 'u8[32768]{0}', space=vmem, size = 0x8000, scoped, tag = 'input window, operand 3, single buffered']
    #allocation8 [shape = 'u8[32768]{0}', space=vmem, size = 0x8000, scoped, tag = 'input window, operand 5, single buffered']
    #allocation9 [shape = 's32[1]{0}', space=sflag, size = 0x4, scoped, tag = 'scoped memory for tpu_custom_call.1']
    #allocation10 [shape = 'u8[32768]{0}', space=vmem, size = 0x8000, scoped, tag = 'input window, operand 7, single buffered']
    #allocation11 [shape = 'u8[4096]{0}', space=vmem, size = 0x1000, scoped, tag = 'output window, operand 0, single buffered']
    %14 = vsyncpa [#allocation3], 0
    %15 = vsyncpa [#allocation6], 0
    %16 = vsyncpa [#allocation9], 0
    %17 = vsyncpa [#allocation4], 0
    // Predicated region
    $region2: #{tpu_custom_call.1} parent=1 // pred_check
      _
    $region3: #{tpu_custom_call.1} parent=1 // pred_check_branch
      %19 = sbr.rel (0) target = $region5
    $region4: #{tpu_custom_call.1} parent=1 // pred_region
      %s21 = ssub.s32 128, 128
      %22 = vsyncadd [#allocation3], %s21
      %s24 = sshll.u32 [#allocation2], 4
      %s25 = int_to_ptr.vmem [resolvable:$true] %s24
      %27 = dma.hbm_to_vmem [thread:$0]  %s0, 128, %s25, [#allocation3]
    $region5: #{tpu_custom_call.1} parent=1 // pred_fallthru
      _
    // Predicated region
    $region6: #{tpu_custom_call.1} parent=1 // pred_check
      _
    $region7: #{tpu_custom_call.1} parent=1 // pred_check_branch
      %29 = sbr.rel (0) target = $region9
    $region8: #{tpu_custom_call.1} parent=1 // pred_region
      %s31 = ssub.s32 1024, 1024
      %32 = vsyncadd [#allocation6], %s31
      %s33 = sshll.u32 [#allocation5], 4
      %s34 = int_to_ptr.vmem [resolvable:$true] %s33
      %39 = dma.hbm_to_vmem [thread:$0]  %s1, 1024, %s34, [#allocation6], 64, 64, 4
    $region9: #{tpu_custom_call.1} parent=1 // pred_fallthru
      _
    // Predicated region
    $region10: #{tpu_custom_call.1} parent=1 // pred_check
      _
    $region11: #{tpu_custom_call.1} parent=1 // pred_check_branch
      %41 = sbr.rel (0) target = $region13
    $region12: #{tpu_custom_call.1} parent=1 // pred_region
      _
    $region13: #{tpu_custom_call.1} parent=1 // pred_fallthru
      _
    // Predicated region
    $region14: #{tpu_custom_call.1} parent=1 // pred_check
      _
    $region15: #{tpu_custom_call.1} parent=1 // pred_check_branch
      %43 = sbr.rel (0) target = $region17
    $region16: #{tpu_custom_call.1} parent=1 // pred_region
      %s45 = ssub.s32 1024, 1024
      %46 = vsyncadd [#allocation6], %s45
      %s47 = sshll.u32 [#allocation7], 4
      %s48 = int_to_ptr.vmem [resolvable:$true] %s47
      %53 = dma.hbm_to_vmem [thread:$0]  %s3, 1024, %s48, [#allocation6], 64, 64, 4
    $region17: #{tpu_custom_call.1} parent=1 // pred_fallthru
      _
    // Predicated region
    $region18: #{tpu_custom_call.1} parent=1 // pred_check
      _
    $region19: #{tpu_custom_call.1} parent=1 // pred_check_branch
      %55 = sbr.rel (0) target = $region21
    $region20: #{tpu_custom_call.1} parent=1 // pred_region
      _
    $region21: #{tpu_custom_call.1} parent=1 // pred_fallthru
      _
    // Predicated region
    $region22: #{tpu_custom_call.1} parent=1 // pred_check
      _
    $region23: #{tpu_custom_call.1} parent=1 // pred_check_branch
      %57 = sbr.rel (0) target = $region25
    $region24: #{tpu_custom_call.1} parent=1 // pred_region
      %s59 = ssub.s32 1024, 1024
      %60 = vsyncadd [#allocation9], %s59
      %s61 = sshll.u32 [#allocation8], 4
      %s62 = int_to_ptr.vmem [resolvable:$true] %s61
      %67 = dma.hbm_to_vmem [thread:$0]  %s5, 1024, %s62, [#allocation9], 64, 64, 4
    $region25: #{tpu_custom_call.1} parent=1 // pred_fallthru
      _
    // Predicated region
    $region26: #{tpu_custom_call.1} parent=1 // pred_check
      _
    $region27: #{tpu_custom_call.1} parent=1 // pred_check_branch
      %69 = sbr.rel (0) target = $region29
    $region28: #{tpu_custom_call.1} parent=1 // pred_region
      _
    $region29: #{tpu_custom_call.1} parent=1 // pred_fallthru
      _
    // Predicated region
    $region30: #{tpu_custom_call.1} parent=1 // pred_check
      _
    $region31: #{tpu_custom_call.1} parent=1 // pred_check_branch
      %71 = sbr.rel (0) target = $region33
    $region32: #{tpu_custom_call.1} parent=1 // pred_region
      %s73 = ssub.s32 1024, 1024
      %74 = vsyncadd [#allocation9], %s73
      %s75 = sshll.u32 [#allocation10], 4
      %s76 = int_to_ptr.vmem [resolvable:$true] %s75
      %81 = dma.hbm_to_vmem [thread:$0]  %s7, 1024, %s76, [#allocation9], 64, 64, 4
    $region33: #{tpu_custom_call.1} parent=1 // pred_fallthru
      _
    // Predicated region
    $region34: #{tpu_custom_call.1} parent=1 // pred_check
      _
    $region35: #{tpu_custom_call.1} parent=1 // pred_check_branch
      %83 = sbr.rel (0) target = $region37
    $region36: #{tpu_custom_call.1} parent=1 // pred_region
      _
    $region37: #{tpu_custom_call.1} parent=1 // pred_fallthru
      _
    // Predicated region
    $region38: #{tpu_custom_call.1} parent=1 // pred_check
      _
    $region39: #{tpu_custom_call.1} parent=1 // pred_check_branch
      %85 = sbr.rel (0) target = $region41
    $region40: #{tpu_custom_call.1} parent=1 // pred_region
      %86 = dma.done [#allocation3], 128
    $region41: #{tpu_custom_call.1} parent=1 // pred_fallthru
      _
    // Predicated region
    $region42: #{tpu_custom_call.1} parent=1 // pred_check
      _
    $region43: #{tpu_custom_call.1} parent=1 // pred_check_branch
      %88 = sbr.rel (0) target = $region45
    $region44: #{tpu_custom_call.1} parent=1 // pred_region
      %89 = dma.done [#allocation6], 1024
    $region45: #{tpu_custom_call.1} parent=1 // pred_fallthru
      _
    // Predicated region
    $region46: #{tpu_custom_call.1} parent=1 // pred_check
      _
    $region47: #{tpu_custom_call.1} parent=1 // pred_check_branch
      %91 = sbr.rel (0) target = $region49
    $region48: #{tpu_custom_call.1} parent=1 // pred_region
      %92 = dma.done [#allocation6], 1024
    $region49: #{tpu_custom_call.1} parent=1 // pred_fallthru
      _
    // Predicated region
    $region50: #{tpu_custom_call.1} parent=1 // pred_check
      _
    $region51: #{tpu_custom_call.1} parent=1 // pred_check_branch
      %94 = sbr.rel (0) target = $region53
    $region52: #{tpu_custom_call.1} parent=1 // pred_region
      %95 = dma.done [#allocation9], 1024
    $region53: #{tpu_custom_call.1} parent=1 // pred_fallthru
      _
    // Predicated region
    $region54: #{tpu_custom_call.1} parent=1 // pred_check
      _
    $region55: #{tpu_custom_call.1} parent=1 // pred_check_branch
      %97 = sbr.rel (0) target = $region57
    $region56: #{tpu_custom_call.1} parent=1 // pred_region
      %98 = dma.done [#allocation9], 1024
    $region57: #{tpu_custom_call.1} parent=1 // pred_fallthru
      _
    %v100 = vld [vmem:[#allocation2] sm:$0xff]
    %v101 = vpack.c.bf16 %v100, %v100
    %v102 = vld [vmem:[#allocation5] sm:$0xf]
    %v103 = vld [vmem:[#allocation5 + $0x4] sm:$0xf]
    %v104 = vld [vmem:[#allocation5 + $0x8] sm:$0xf]
    %v105 = vld [vmem:[#allocation5 + $0xc] sm:$0xf]
    %v106 = vld [vmem:[#allocation5 + $0x10] sm:$0xf]
    %v107 = vld [vmem:[#allocation5 + $0x14] sm:$0xf]
    %v108 = vld [vmem:[#allocation5 + $0x18] sm:$0xf]
    %v109 = vld [vmem:[#allocation5 + $0x1c] sm:$0xf]
    %v110 = vld [vmem:[#allocation5 + $0x20] sm:$0xf]
    %v111 = vld [vmem:[#allocation5 + $0x24] sm:$0xf]
    %v112 = vld [vmem:[#allocation5 + $0x28] sm:$0xf]
    %v113 = vld [vmem:[#allocation5 + $0x2c] sm:$0xf]
    %v114 = vld [vmem:[#allocation5 + $0x30] sm:$0xf]
    %v115 = vld [vmem:[#allocation5 + $0x34] sm:$0xf]
    %v116 = vld [vmem:[#allocation5 + $0x38] sm:$0xf]
    %v117 = vld [vmem:[#allocation5 + $0x3c] sm:$0xf]
    %v118 = vld [vmem:[%s2] sm:$0x1]
    %v120 = vlaneseq
    %v121 = vshrl.u32 %v120, 7
    %v122 = vsub.s32 0, %v121
    %v123 = vrot.slane %v118, %v122
    %v141 = vunpack.c.l.b16 %v102
    %v142 = vunpack.c.l.b16 %v103
    %v143 = vunpack.c.l.b16 %v104
    %v144 = vunpack.c.l.b16 %v105
    %v145 = vunpack.c.l.b16 %v106
    %v146 = vunpack.c.l.b16 %v107
    %v147 = vunpack.c.l.b16 %v108
    %v148 = vunpack.c.l.b16 %v109
    %v149 = vunpack.c.l.b16 %v110
    %v150 = vunpack.c.l.b16 %v111
    %v151 = vunpack.c.l.b16 %v112
    %v152 = vunpack.c.l.b16 %v113
    %v153 = vunpack.c.l.b16 %v114
    %v154 = vunpack.c.l.b16 %v115
    %v155 = vunpack.c.l.b16 %v116
    %v156 = vunpack.c.l.b16 %v117
    %v157 = vpack.c.b16 %v142, %v141
    %v158 = vpack.c.b16 %v144, %v143
    %v159 = vpack.c.b16 %v146, %v145
    %v160 = vpack.c.b16 %v148, %v147
    %v161 = vpack.c.b16 %v150, %v149
    %v162 = vpack.c.b16 %v152, %v151
    %v163 = vpack.c.b16 %v154, %v153
    %v164 = vpack.c.b16 %v156, %v155
    %173 = vmatprep.subr.bf16.mxu0 0
    %174 = vmatpush1.bf16.msra.mxu0 %v157
    %175 = vmatprep.subr.bf16.mxu0 0
    %176 = vmatpush1.bf16.msra.mxu0 %v158
    %177 = vmatprep.subr.bf16.mxu0 0
    %178 = vmatpush1.bf16.msra.mxu0 %v159
    %179 = vmatprep.subr.bf16.mxu0 0
    %180 = vmatpush1.bf16.msra.mxu0 %v160
    %181 = vmatprep.subr.bf16.mxu0 0
    %182 = vmatpush1.bf16.msra.mxu0 %v161
    %183 = vmatprep.subr.bf16.mxu0 0
    %184 = vmatpush1.bf16.msra.mxu0 %v162
    %185 = vmatprep.subr.bf16.mxu0 0
    %186 = vmatpush1.bf16.msra.mxu0 %v163
    %187 = vmatprep.subr.bf16.mxu0 0
    %188 = vmatpush1.bf16.msra.mxu0 %v164
    %189 = vmatprep.subr.bf16.mxu0 0
    %190 = vmatpush1.bf16.msra.mxu0 0
    %191 = vmatprep.subr.bf16.mxu0 0
    %192 = vmatpush1.bf16.msra.mxu0 0
    %193 = vmatprep.subr.bf16.mxu0 0
    %194 = vmatpush1.bf16.msra.mxu0 0
    %195 = vmatprep.subr.bf16.mxu0 0
    %196 = vmatpush1.bf16.msra.mxu0 0
    %197 = vmatprep.subr.bf16.mxu0 0
    %198 = vmatpush1.bf16.msra.mxu0 0
    %199 = vmatprep.subr.bf16.mxu0 0
    %200 = vmatpush1.bf16.msra.mxu0 0
    %201 = vmatprep.subr.bf16.mxu0 0
    %202 = vmatpush1.bf16.msra.mxu0 0
    %203 = vmatprep.subr.bf16.mxu0 0
    %204 = vmatpush1.bf16.msra.mxu0 0
    %205 = vmatprep.mubr.bf16.mxu0 0
    %206 = vmatmul.mubr.bf16.gmra.mrb[0].mxu0 %v101
    %v207 = vpop.f32.mrb[0].mxu0
    %v208 = vadd.f32 %v123, %v207
    %v209 = vpop.f32.mrb[0].mxu0
    %v210 = vpop.f32.mrb[0].mxu0
    %v211 = vpop.f32.mrb[0].mxu0
    %212 = vdwg.mxu0
    %v213 = vpack.c.bf16 %v208, %v208
    %v214 = vld [vmem:[#allocation7] sm:$0xf]
    %v215 = vld [vmem:[#allocation7 + $0x4] sm:$0xf]
    %v216 = vld [vmem:[#allocation7 + $0x8] sm:$0xf]
    %v217 = vld [vmem:[#allocation7 + $0xc] sm:$0xf]
    %v218 = vld [vmem:[#allocation7 + $0x10] sm:$0xf]
    %v219 = vld [vmem:[#allocation7 + $0x14] sm:$0xf]
    %v220 = vld [vmem:[#allocation7 + $0x18] sm:$0xf]
    %v221 = vld [vmem:[#allocation7 + $0x1c] sm:$0xf]
    %v222 = vld [vmem:[#allocation7 + $0x20] sm:$0xf]
    %v223 = vld [vmem:[#allocation7 + $0x24] sm:$0xf]
    %v224 = vld [vmem:[#allocation7 + $0x28] sm:$0xf]
    %v225 = vld [vmem:[#allocation7 + $0x2c] sm:$0xf]
    %v226 = vld [vmem:[#allocation7 + $0x30] sm:$0xf]
    %v227 = vld [vmem:[#allocation7 + $0x34] sm:$0xf]
    %v228 = vld [vmem:[#allocation7 + $0x38] sm:$0xf]
    %v229 = vld [vmem:[#allocation7 + $0x3c] sm:$0xf]
    %v230 = vld [vmem:[%s4] sm:$0x1]
    %v232 = vlaneseq
    %v233 = vshrl.u32 %v232, 7
    %v234 = vsub.s32 0, %v233
    %v235 = vrot.slane %v230, %v234
    %v253 = vunpack.c.l.b16 %v214
    %v254 = vunpack.c.l.b16 %v215
    %v255 = vunpack.c.l.b16 %v216
    %v256 = vunpack.c.l.b16 %v217
    %v257 = vunpack.c.l.b16 %v218
    %v258 = vunpack.c.l.b16 %v219
    %v259 = vunpack.c.l.b16 %v220
    %v260 = vunpack.c.l.b16 %v221
    %v261 = vunpack.c.l.b16 %v222
    %v262 = vunpack.c.l.b16 %v223
    %v263 = vunpack.c.l.b16 %v224
    %v264 = vunpack.c.l.b16 %v225
    %v265 = vunpack.c.l.b16 %v226
    %v266 = vunpack.c.l.b16 %v227
    %v267 = vunpack.c.l.b16 %v228
    %v268 = vunpack.c.l.b16 %v229
    %v269 = vpack.c.b16 %v254, %v253
    %v270 = vpack.c.b16 %v256, %v255
    %v271 = vpack.c.b16 %v258, %v257
    %v272 = vpack.c.b16 %v260, %v259
    %v273 = vpack.c.b16 %v262, %v261
    %v274 = vpack.c.b16 %v264, %v263
    %v275 = vpack.c.b16 %v266, %v265
    %v276 = vpack.c.b16 %v268, %v267
    %285 = vmatprep.subr.bf16.mxu0 0
    %286 = vmatpush1.bf16.msra.mxu0 %v269
    %287 = vmatprep.subr.bf16.mxu0 0
    %288 = vmatpush1.bf16.msra.mxu0 %v270
    %289 = vmatprep.subr.bf16.mxu0 0
    %290 = vmatpush1.bf16.msra.mxu0 %v271
    %291 = vmatprep.subr.bf16.mxu0 0
    %292 = vmatpush1.bf16.msra.mxu0 %v272
    %293 = vmatprep.subr.bf16.mxu0 0
    %294 = vmatpush1.bf16.msra.mxu0 %v273
    %295 = vmatprep.subr.bf16.mxu0 0
    %296 = vmatpush1.bf16.msra.mxu0 %v274
    %297 = vmatprep.subr.bf16.mxu0 0
    %298 = vmatpush1.bf16.msra.mxu0 %v275
    %299 = vmatprep.subr.bf16.mxu0 0
    %300 = vmatpush1.bf16.msra.mxu0 %v276
    %301 = vmatprep.subr.bf16.mxu0 0
    %302 = vmatpush1.bf16.msra.mxu0 0
    %303 = vmatprep.subr.bf16.mxu0 0
    %304 = vmatpush1.bf16.msra.mxu0 0
    %305 = vmatprep.subr.bf16.mxu0 0
    %306 = vmatpush1.bf16.msra.mxu0 0
    %307 = vmatprep.subr.bf16.mxu0 0
    %308 = vmatpush1.bf16.msra.mxu0 0
    %309 = vmatprep.subr.bf16.mxu0 0
    %310 = vmatpush1.bf16.msra.mxu0 0
    %311 = vmatprep.subr.bf16.mxu0 0
    %312 = vmatpush1.bf16.msra.mxu0 0
    %313 = vmatprep.subr.bf16.mxu0 0
    %314 = vmatpush1.bf16.msra.mxu0 0
    %315 = vmatprep.subr.bf16.mxu0 0
    %316 = vmatpush1.bf16.msra.mxu0 0
    %317 = vmatprep.mubr.bf16.mxu0 0
    %318 = vmatmul.mubr.bf16.gmra.mrb[0].mxu0 %v213
    %v319 = vpop.f32.mrb[0].mxu0
    %v320 = vadd.f32 %v235, %v319
    %v321 = vpop.f32.mrb[0].mxu0
    %v322 = vpop.f32.mrb[0].mxu0
    %v323 = vpop.f32.mrb[0].mxu0
    %324 = vdwg.mxu0
    %v325 = vpack.c.bf16 %v320, %v320
    %v326 = vld [vmem:[#allocation8] sm:$0xf]
    %v327 = vld [vmem:[#allocation8 + $0x4] sm:$0xf]
    %v328 = vld [vmem:[#allocation8 + $0x8] sm:$0xf]
    %v329 = vld [vmem:[#allocation8 + $0xc] sm:$0xf]
    %v330 = vld [vmem:[#allocation8 + $0x10] sm:$0xf]
    %v331 = vld [vmem:[#allocation8 + $0x14] sm:$0xf]
    %v332 = vld [vmem:[#allocation8 + $0x18] sm:$0xf]
    %v333 = vld [vmem:[#allocation8 + $0x1c] sm:$0xf]
    %v334 = vld [vmem:[#allocation8 + $0x20] sm:$0xf]
    %v335 = vld [vmem:[#allocation8 + $0x24] sm:$0xf]
    %v336 = vld [vmem:[#allocation8 + $0x28] sm:$0xf]
    %v337 = vld [vmem:[#allocation8 + $0x2c] sm:$0xf]
    %v338 = vld [vmem:[#allocation8 + $0x30] sm:$0xf]
    %v339 = vld [vmem:[#allocation8 + $0x34] sm:$0xf]
    %v340 = vld [vmem:[#allocation8 + $0x38] sm:$0xf]
    %v341 = vld [vmem:[#allocation8 + $0x3c] sm:$0xf]
    %v342 = vld [vmem:[%s6] sm:$0x1]
    %v344 = vlaneseq
    %v345 = vshrl.u32 %v344, 7
    %v346 = vsub.s32 0, %v345
    %v347 = vrot.slane %v342, %v346
    %v365 = vunpack.c.l.b16 %v326
    %v366 = vunpack.c.l.b16 %v327
    %v367 = vunpack.c.l.b16 %v328
    %v368 = vunpack.c.l.b16 %v329
    %v369 = vunpack.c.l.b16 %v330
    %v370 = vunpack.c.l.b16 %v331
    %v371 = vunpack.c.l.b16 %v332
    %v372 = vunpack.c.l.b16 %v333
    %v373 = vunpack.c.l.b16 %v334
    %v374 = vunpack.c.l.b16 %v335
    %v375 = vunpack.c.l.b16 %v336
    %v376 = vunpack.c.l.b16 %v337
    %v377 = vunpack.c.l.b16 %v338
    %v378 = vunpack.c.l.b16 %v339
    %v379 = vunpack.c.l.b16 %v340
    %v380 = vunpack.c.l.b16 %v341
    %v381 = vpack.c.b16 %v366, %v365
    %v382 = vpack.c.b16 %v368, %v367
    %v383 = vpack.c.b16 %v370, %v369
    %v384 = vpack.c.b16 %v372, %v371
    %v385 = vpack.c.b16 %v374, %v373
    %v386 = vpack.c.b16 %v376, %v375
    %v387 = vpack.c.b16 %v378, %v377
    %v388 = vpack.c.b16 %v380, %v379
    %397 = vmatprep.subr.bf16.mxu0 0
    %398 = vmatpush1.bf16.msra.mxu0 %v381
    %399 = vmatprep.subr.bf16.mxu0 0
    %400 = vmatpush1.bf16.msra.mxu0 %v382
    %401 = vmatprep.subr.bf16.mxu0 0
    %402 = vmatpush1.bf16.msra.mxu0 %v383
    %403 = vmatprep.subr.bf16.mxu0 0
    %404 = vmatpush1.bf16.msra.mxu0 %v384
    %405 = vmatprep.subr.bf16.mxu0 0
    %406 = vmatpush1.bf16.msra.mxu0 %v385
    %407 = vmatprep.subr.bf16.mxu0 0
    %408 = vmatpush1.bf16.msra.mxu0 %v386
    %409 = vmatprep.subr.bf16.mxu0 0
    %410 = vmatpush1.bf16.msra.mxu0 %v387
    %411 = vmatprep.subr.bf16.mxu0 0
    %412 = vmatpush1.bf16.msra.mxu0 %v388
    %413 = vmatprep.subr.bf16.mxu0 0
    %414 = vmatpush1.bf16.msra.mxu0 0
    %415 = vmatprep.subr.bf16.mxu0 0
    %416 = vmatpush1.bf16.msra.mxu0 0
    %417 = vmatprep.subr.bf16.mxu0 0
    %418 = vmatpush1.bf16.msra.mxu0 0
    %419 = vmatprep.subr.bf16.mxu0 0
    %420 = vmatpush1.bf16.msra.mxu0 0
    %421 = vmatprep.subr.bf16.mxu0 0
    %422 = vmatpush1.bf16.msra.mxu0 0
    %423 = vmatprep.subr.bf16.mxu0 0
    %424 = vmatpush1.bf16.msra.mxu0 0
    %425 = vmatprep.subr.bf16.mxu0 0
    %426 = vmatpush1.bf16.msra.mxu0 0
    %427 = vmatprep.subr.bf16.mxu0 0
    %428 = vmatpush1.bf16.msra.mxu0 0
    %429 = vmatprep.mubr.bf16.mxu0 0
    %430 = vmatmul.mubr.bf16.gmra.mrb[0].mxu0 %v325
    %v431 = vpop.f32.mrb[0].mxu0
    %v432 = vadd.f32 %v347, %v431
    %v433 = vpop.f32.mrb[0].mxu0
    %v434 = vpop.f32.mrb[0].mxu0
    %v435 = vpop.f32.mrb[0].mxu0
    %436 = vdwg.mxu0
    %v437 = vpack.c.bf16 %v432, %v432
    %v438 = vld [vmem:[#allocation10] sm:$0xf]
    %v439 = vld [vmem:[#allocation10 + $0x4] sm:$0xf]
    %v440 = vld [vmem:[#allocation10 + $0x8] sm:$0xf]
    %v441 = vld [vmem:[#allocation10 + $0xc] sm:$0xf]
    %v442 = vld [vmem:[#allocation10 + $0x10] sm:$0xf]
    %v443 = vld [vmem:[#allocation10 + $0x14] sm:$0xf]
    %v444 = vld [vmem:[#allocation10 + $0x18] sm:$0xf]
    %v445 = vld [vmem:[#allocation10 + $0x1c] sm:$0xf]
    %v446 = vld [vmem:[#allocation10 + $0x20] sm:$0xf]
    %v447 = vld [vmem:[#allocation10 + $0x24] sm:$0xf]
    %v448 = vld [vmem:[#allocation10 + $0x28] sm:$0xf]
    %v449 = vld [vmem:[#allocation10 + $0x2c] sm:$0xf]
    %v450 = vld [vmem:[#allocation10 + $0x30] sm:$0xf]
    %v451 = vld [vmem:[#allocation10 + $0x34] sm:$0xf]
    %v452 = vld [vmem:[#allocation10 + $0x38] sm:$0xf]
    %v453 = vld [vmem:[#allocation10 + $0x3c] sm:$0xf]
    %v454 = vld [vmem:[%s8] sm:$0x1]
    %v456 = vlaneseq
    %v457 = vshrl.u32 %v456, 7
    %v458 = vsub.s32 0, %v457
    %v459 = vrot.slane %v454, %v458
    %v477 = vunpack.c.l.b16 %v438
    %v478 = vunpack.c.l.b16 %v439
    %v479 = vunpack.c.l.b16 %v440
    %v480 = vunpack.c.l.b16 %v441
    %v481 = vunpack.c.l.b16 %v442
    %v482 = vunpack.c.l.b16 %v443
    %v483 = vunpack.c.l.b16 %v444
    %v484 = vunpack.c.l.b16 %v445
    %v485 = vunpack.c.l.b16 %v446
    %v486 = vunpack.c.l.b16 %v447
    %v487 = vunpack.c.l.b16 %v448
    %v488 = vunpack.c.l.b16 %v449
    %v489 = vunpack.c.l.b16 %v450
    %v490 = vunpack.c.l.b16 %v451
    %v491 = vunpack.c.l.b16 %v452
    %v492 = vunpack.c.l.b16 %v453
    %v493 = vpack.c.b16 %v478, %v477
    %v494 = vpack.c.b16 %v480, %v479
    %v495 = vpack.c.b16 %v482, %v481
    %v496 = vpack.c.b16 %v484, %v483
    %v497 = vpack.c.b16 %v486, %v485
    %v498 = vpack.c.b16 %v488, %v487
    %v499 = vpack.c.b16 %v490, %v489
    %v500 = vpack.c.b16 %v492, %v491
    %509 = vmatprep.subr.bf16.mxu0 0
    %510 = vmatpush1.bf16.msra.mxu0 %v493
    %511 = vmatprep.subr.bf16.mxu0 0
    %512 = vmatpush1.bf16.msra.mxu0 %v494
    %513 = vmatprep.subr.bf16.mxu0 0
    %514 = vmatpush1.bf16.msra.mxu0 %v495
    %515 = vmatprep.subr.bf16.mxu0 0
    %516 = vmatpush1.bf16.msra.mxu0 %v496
    %517 = vmatprep.subr.bf16.mxu0 0
    %518 = vmatpush1.bf16.msra.mxu0 %v497
    %519 = vmatprep.subr.bf16.mxu0 0
    %520 = vmatpush1.bf16.msra.mxu0 %v498
    %521 = vmatprep.subr.bf16.mxu0 0
    %522 = vmatpush1.bf16.msra.mxu0 %v499
    %523 = vmatprep.subr.bf16.mxu0 0
    %524 = vmatpush1.bf16.msra.mxu0 %v500
    %525 = vmatprep.subr.bf16.mxu0 0
    %526 = vmatpush1.bf16.msra.mxu0 0
    %527 = vmatprep.subr.bf16.mxu0 0
    %528 = vmatpush1.bf16.msra.mxu0 0
    %529 = vmatprep.subr.bf16.mxu0 0
    %530 = vmatpush1.bf16.msra.mxu0 0
    %531 = vmatprep.subr.bf16.mxu0 0
    %532 = vmatpush1.bf16.msra.mxu0 0
    %533 = vmatprep.subr.bf16.mxu0 0
    %534 = vmatpush1.bf16.msra.mxu0 0
    %535 = vmatprep.subr.bf16.mxu0 0
    %536 = vmatpush1.bf16.msra.mxu0 0
    %537 = vmatprep.subr.bf16.mxu0 0
    %538 = vmatpush1.bf16.msra.mxu0 0
    %539 = vmatprep.subr.bf16.mxu0 0
    %540 = vmatpush1.bf16.msra.mxu0 0
    %541 = vmatprep.mubr.bf16.mxu0 0
    %542 = vmatmul.mubr.bf16.gmra.mrb[0].mxu0 %v437
    %v543 = vpop.f32.mrb[0].mxu0
    %v544 = vadd.f32 %v459, %v543
    %v545 = vpop.f32.mrb[0].mxu0
    %v546 = vpop.f32.mrb[0].mxu0
    %v547 = vpop.f32.mrb[0].mxu0
    %548 = vdwg.mxu0
    %549 = vst [vmem:[#allocation11] sm:$0xff] %v544
    // Predicated region
    $region58: #{tpu_custom_call.1} parent=1 // pred_check
      _
    $region59: #{tpu_custom_call.1} parent=1 // pred_check_branch
      %551 = sbr.rel (0) target = $region61
    $region60: #{tpu_custom_call.1} parent=1 // pred_region
      %s553 = ssub.s32 128, 128
      %554 = vsyncadd [#allocation4], %s553
      %s556 = sshll.u32 [#allocation11], 4
      %s557 = int_to_ptr.vmem [resolvable:$true] %s556
      %559 = dma.vmem_to_hbm [thread:$0]  %s557, 128, %s9, [#allocation4]
    $region61: #{tpu_custom_call.1} parent=1 // pred_fallthru
      _
    // Predicated region
    $region62: #{tpu_custom_call.1} parent=1 // pred_check
      _
    $region63: #{tpu_custom_call.1} parent=1 // pred_check_branch
      %561 = sbr.rel (0) target = $region65
    $region64: #{tpu_custom_call.1} parent=1 // pred_region
      %562 = dma.done [#allocation4], 128
    $region65: #{tpu_custom_call.1} parent=1 // pred_fallthru
      _
    %563 = vsyncpa [#allocation3], 1
    %564 = vsyncpa [#allocation6], 1
    %565 = vsyncpa [#allocation9], 1
    %566 = vsyncpa [#allocation4], 1

</llo_original>
